<compile_context>
chip_gen: v7x
topology: tpu7x:2x2x1
jax: 0.10.0
libtpu: 0.0.40
codegen_flags: <defaults>
</compile_context>

<pallas_src>
import jax
import jax.numpy as jnp
from jax.experimental import pallas as pl
from jax.experimental.pallas import tpu as pltpu


# ----------------------------------------------------------------------------
# Pallas kernel: one full NHWC image per grid step.
#   out = relu(conv3x3_same(x) + b)
# ----------------------------------------------------------------------------
def _conv3x3_relu_kernel(x_ref, w_ref, b_ref, o_ref):
    # x_ref : (H+2, W*C)    bf16  image zero-padded in H only; (W, C) folded
    #                             onto the lane axis (lane-dense DMA load).
    # w_ref : (3, W*C, W*O) bf16  per-kh banded weight matrices; the zero band
    #                             implements SAME padding along W for free.
    # b_ref : (1, W*O)      f32   bias replicated per output column.
    # o_ref : (H, W*O)      f32   NHWC output slab, lane width W*O (=128 here)
    #                             -> unmasked, lane-dense stores.
    H = o_ref.shape[0]
    WO = o_ref.shape[1]

    # Upcast once so the kh row-shifts are plain 32-bit sublane slices.
    xv = x_ref[...].astype(jnp.float32)                          # (H+2, W*C)

    acc = jnp.broadcast_to(b_ref[...], (H, WO)).astype(jnp.float32)
    for dh in range(3):                                          # unrolled
        xs = xv[dh:dh + H, :].astype(jnp.bfloat16)               # (H, W*C)
        acc = acc + jnp.dot(xs, w_ref[dh],
                            preferred_element_type=jnp.float32)  # MXU, f32 acc
    o_ref[...] = jnp.maximum(acc, 0.0).astype(o_ref.dtype)


def conv3x3_relu_pallas(x_nhwc, weight, bias):
    """3x3 / stride-1 / SAME conv + ReLU, NHWC in -> NHWC out.

    x_nhwc : (B, H, W, C) float32
    weight : (O, C, 3, 3) float32  (PyTorch OIHW conv layout)
    bias   : (O,)         float32
    returns: (B, H, W, O) float32
    """
    B, H, W, C = x_nhwc.shape
    O = weight.shape[0]
    WC, WO = W * C, W * O

    # --- glue: single fused pad(H)+cast+reshape pass (no im2col, no transpose)
    xp = (jnp.pad(x_nhwc, ((0, 0), (1, 1), (0, 0), (0, 0)))
          .astype(jnp.bfloat16)
          .reshape(B, H + 2, WC))                  # contiguous merge -> free

    # --- banded weights:  wband[dh, win*C + c, w*O + o]
    #       = weight[o, c, dh, win - w + 1]   if 0 <= win - w + 1 <= 2 else 0
    win = jnp.arange(W)
    dw = win[:, None] - win[None, :] + 1                         # (W_in, W_out)
    valid = ((dw >= 0) & (dw <= 2)).astype(weight.dtype)
    wt = jnp.transpose(weight, (2, 3, 1, 0))                     # (dh, dw, C, O)
    band = wt[:, jnp.clip(dw, 0, 2)] * valid[None, :, :, None, None]
    wband = (jnp.transpose(band, (0, 1, 3, 2, 4))                # (dh,Win,C,Wout,O)
             .reshape(3, WC, WO)
             .astype(jnp.bfloat16))
    brow = jnp.tile(bias, W).reshape(1, WO).astype(jnp.float32)  # col w*O+o -> b[o]

    out = pl.pallas_call(
        _conv3x3_relu_kernel,
        out_shape=jax.ShapeDtypeStruct((B, H, WO), jnp.float32),
        grid_spec=pltpu.PrefetchScalarGridSpec(
            num_scalar_prefetch=0,
            grid=(B,),                                # one full image per step
            in_specs=[
                pl.BlockSpec((None, H + 2, WC), lambda b: (b, 0, 0)),
                pl.BlockSpec((3, WC, WO), lambda b: (0, 0, 0)),
                pl.BlockSpec((1, WO), lambda b: (0, 0)),
            ],
            out_specs=pl.BlockSpec((None, H, WO), lambda b: (b, 0, 0)),
        ),
        compiler_params=pltpu.CompilerParams(
            dimension_semantics=("parallel",),        # shard batch across TCs
        ),
    )(xp, wband, brow)

    # (B, H, W*O) -> (B, H, W, O): splits the contiguous minor dim, free.
    return out.reshape(B, H, W, O)


# ----------------------------------------------------------------------------
# Inner model + ModelWrapper (pass-through, mirroring the PyTorch semantics)
# ----------------------------------------------------------------------------
class SmallConvModel:
    """Concrete inner model: Conv2d(C->O, 3x3, pad=1) + ReLU, NHWC, Pallas hot path."""

    def __init__(self, in_ch=4, out_ch=8, key=jax.random.PRNGKey(42)):
        kw, kb = jax.random.split(key)
        fan_in = in_ch * 9
        self.weight = (jax.random.normal(kw, (out_ch, in_ch, 3, 3), jnp.float32)
                       / jnp.sqrt(fan_in))
        self.bias = jax.random.normal(kb, (out_ch,), jnp.float32) * 0.01
        self.in_channels = in_ch
        self.out_channels = out_ch
        self._fwd = jax.jit(conv3x3_relu_pallas)

    def __call__(self, x_nhwc):
        return self._fwd(x_nhwc, self.weight, self.bias)


class ModelWrapper:
    """JAX equivalent of the PyTorch ModelWrapper: pure delegation."""

    def __init__(self, _model):
        object.__setattr__(self, "model", _model)

    def forward(self, x):
        return self.model(x)

    def __call__(self, x):
        return self.forward(x)

    def __getattr__(self, name):
        # Attributes not found on the wrapper are forwarded to the wrapped model.
        return getattr(object.__getattribute__(self, "model"), name)

    def __getitem__(self, key):
        return self.model[key]


# ----------------------------------------------------------------------------
if __name__ == "__main__":
    key = jax.random.PRNGKey(0)
    B, H, W, C, O = 2, 16, 16, 4, 8
    x = jax.random.normal(key, (B, H, W, C), jnp.float32)      # NHWC

    model = SmallConvModel(in_ch=C, out_ch=O)
    wrapped = ModelWrapper(model)

    out = jax.block_until_ready(wrapped(x))

    # Reference: plain-JAX SAME conv with the same bf16 operand rounding the
    # kernel uses (bf16 activations & weights, f32 accumulation).
    x_bf = x.astype(jnp.bfloat16).astype(jnp.float32)
    w_bf = model.weight.astype(jnp.bfloat16).astype(jnp.float32)
    ref = jax.lax.conv_general_dilated(
        x_bf, w_bf, window_strides=(1, 1), padding="SAME",
        dimension_numbers=("NHWC", "OIHW", "NHWC"),
        precision=jax.lax.Precision.HIGHEST,
    ) + model.bias.reshape(1, 1, 1, -1)
    ref = jnp.maximum(ref, 0.0)

    assert out.shape == (B, H, W, O)
    assert jnp.allclose(out, ref, atol=1e-3, rtol=1e-3), \
        float(jnp.max(jnp.abs(out - ref)))

    # Delegation semantics of the wrapper (attribute forwarding).
    assert wrapped.out_channels == O

    print("KERNEL_OK")
</pallas_src>

<mosaic_0001>
module attributes {stable_mosaic.version = 11 : i64} {
  func.func @_conv3x3_relu_kernel(%arg0: i32, %arg1: memref<1x18x64xbf16, #tpu.memory_space<vmem>>, %arg2: memref<3x64x128xbf16, #tpu.memory_space<vmem>>, %arg3: memref<1x128xf32, #tpu.memory_space<vmem>>, %arg4: memref<1x16x128xf32, #tpu.memory_space<vmem>>) attributes {dimension_semantics = [#tpu.dimension_semantics<parallel>], iteration_bounds = array<i64: 2>, scalar_prefetch = 0 : i64, scratch_operands = 0 : i64, tpu.core_type = #tpu.core_type<tc>, window_params = [{transform_indices = @transform_0, window_bounds = array<i64: 1, 18, 64>}, {pipeline_mode = #tpu.pipeline_mode<synchronous>, transform_indices = @transform_1, window_bounds = array<i64: 3, 64, 128>}, {pipeline_mode = #tpu.pipeline_mode<synchronous>, transform_indices = @transform_2, window_bounds = array<i64: 1, 128>}, {transform_indices = @transform_3, window_bounds = array<i64: 1, 16, 128>}]} {
    %c0 = arith.constant 0 : index
    %c0_0 = arith.constant 0 : index
    %c0_1 = arith.constant 0 : index
    %0 = vector.load %arg1[%c0, %c0_0, %c0_1] : memref<1x18x64xbf16, #tpu.memory_space<vmem>>, vector<1x18x64xbf16>
    %1 = vector.shape_cast %0 : vector<1x18x64xbf16> to vector<18x64xbf16>
    %2 = arith.extf %1 : vector<18x64xbf16> to vector<18x64xf32>
    %c0_2 = arith.constant 0 : index
    %c0_3 = arith.constant 0 : index
    %3 = vector.load %arg3[%c0_2, %c0_3] : memref<1x128xf32, #tpu.memory_space<vmem>>, vector<1x128xf32>
    %4 = vector.shape_cast %3 : vector<1x128xf32> to vector<1x128xf32>
    %5 = vector.broadcast %4 : vector<1x128xf32> to vector<16x128xf32>
    %6 = vector.extract_strided_slice %2 {offsets = [0, 0], sizes = [16, 64], strides = [1, 1]} : vector<18x64xf32> to vector<16x64xf32>
    %7 = arith.truncf %6 : vector<16x64xf32> to vector<16x64xbf16>
    %c0_4 = arith.constant 0 : index
    %c0_5 = arith.constant 0 : index
    %c0_6 = arith.constant 0 : index
    %8 = vector.load %arg2[%c0_4, %c0_5, %c0_6] : memref<3x64x128xbf16, #tpu.memory_space<vmem>>, vector<1x64x128xbf16>
    %9 = vector.shape_cast %8 : vector<1x64x128xbf16> to vector<64x128xbf16>
    %cst = arith.constant dense<0.000000e+00> : vector<16x128xf32>
    %10 = tpu.matmul %7, %9, %cst {dimension_numbers = #tpu.dot_dimension_numbers<[1], [0], [0], [1], [0, 0, 1, 1], [], []>} : vector<16x64xbf16>, vector<64x128xbf16>, vector<16x128xf32> -> vector<16x128xf32>
    %11 = arith.addf %5, %10 : vector<16x128xf32>
    %12 = vector.extract_strided_slice %2 {offsets = [1, 0], sizes = [16, 64], strides = [1, 1]} : vector<18x64xf32> to vector<16x64xf32>
    %13 = arith.truncf %12 : vector<16x64xf32> to vector<16x64xbf16>
    %c1 = arith.constant 1 : index
    %c0_7 = arith.constant 0 : index
    %c0_8 = arith.constant 0 : index
    %14 = vector.load %arg2[%c1, %c0_7, %c0_8] : memref<3x64x128xbf16, #tpu.memory_space<vmem>>, vector<1x64x128xbf16>
    %15 = vector.shape_cast %14 : vector<1x64x128xbf16> to vector<64x128xbf16>
    %cst_9 = arith.constant dense<0.000000e+00> : vector<16x128xf32>
    %16 = tpu.matmul %13, %15, %cst_9 {dimension_numbers = #tpu.dot_dimension_numbers<[1], [0], [0], [1], [0, 0, 1, 1], [], []>} : vector<16x64xbf16>, vector<64x128xbf16>, vector<16x128xf32> -> vector<16x128xf32>
    %17 = arith.addf %11, %16 : vector<16x128xf32>
    %18 = vector.extract_strided_slice %2 {offsets = [2, 0], sizes = [16, 64], strides = [1, 1]} : vector<18x64xf32> to vector<16x64xf32>
    %19 = arith.truncf %18 : vector<16x64xf32> to vector<16x64xbf16>
    %c2 = arith.constant 2 : index
    %c0_10 = arith.constant 0 : index
    %c0_11 = arith.constant 0 : index
    %20 = vector.load %arg2[%c2, %c0_10, %c0_11] : memref<3x64x128xbf16, #tpu.memory_space<vmem>>, vector<1x64x128xbf16>
    %21 = vector.shape_cast %20 : vector<1x64x128xbf16> to vector<64x128xbf16>
    %cst_12 = arith.constant dense<0.000000e+00> : vector<16x128xf32>
    %22 = tpu.matmul %19, %21, %cst_12 {dimension_numbers = #tpu.dot_dimension_numbers<[1], [0], [0], [1], [0, 0, 1, 1], [], []>} : vector<16x64xbf16>, vector<64x128xbf16>, vector<16x128xf32> -> vector<16x128xf32>
    %23 = arith.addf %17, %22 : vector<16x128xf32>
    %cst_13 = arith.constant 0.000000e+00 : f32
    %24 = vector.broadcast %cst_13 : f32 to vector<16x128xf32>
    %25 = arith.maximumf %23, %24 : vector<16x128xf32>
    %c0_14 = arith.constant 0 : index
    %c0_15 = arith.constant 0 : index
    %c0_16 = arith.constant 0 : index
    %26 = vector.load %arg4[%c0_14, %c0_15, %c0_16] : memref<1x16x128xf32, #tpu.memory_space<vmem>>, vector<1x16x128xf32>
    %27 = vector.shape_cast %26 : vector<1x16x128xf32> to vector<16x128xf32>
    %28 = vector.shape_cast %25 : vector<16x128xf32> to vector<1x16x128xf32>
    tpu.vector_store %arg4[%c0_14, %c0_15, %c0_16], %28 {strides = array<i32>} : memref<1x16x128xf32, #tpu.memory_space<vmem>>, vector<1x16x128xf32>,
    return
  }
  func.func @transform_0(%arg0: i32) -> (i32, i32, i32) {
    %c0_i32 = arith.constant 0 : i32
    %c0_i32_0 = arith.constant 0 : i32
    %c0_i32_1 = arith.constant 0 : i32
    return %arg0, %c0_i32, %c0_i32_0 : i32, i32, i32
  }
  func.func @transform_1(%arg0: i32) -> (i32, i32, i32) {
    %c0_i32 = arith.constant 0 : i32
    %c0_i32_0 = arith.constant 0 : i32
    %c0_i32_1 = arith.constant 0 : i32
    %c0_i32_2 = arith.constant 0 : i32
    return %c0_i32, %c0_i32_0, %c0_i32_1 : i32, i32, i32
  }
  func.func @transform_2(%arg0: i32) -> (i32, i32) {
    %c0_i32 = arith.constant 0 : i32
    %c0_i32_0 = arith.constant 0 : i32
    %c0_i32_1 = arith.constant 0 : i32
    return %c0_i32, %c0_i32_0 : i32, i32
  }
  func.func @transform_3(%arg0: i32) -> (i32, i32, i32) {
    %c0_i32 = arith.constant 0 : i32
    %c0_i32_0 = arith.constant 0 : i32
    %c0_i32_1 = arith.constant 0 : i32
    return %arg0, %c0_i32, %c0_i32_0 : i32, i32, i32
  }
}

</mosaic_0001>

<llo_original>
// kernel: tile.8
$region0: #{tile.8}
  #allocation0 [shape = 's32[1]{0}', space=sflag, size = 0x4, scoped, tag = 'scoped memory for tile.8']
  %s0 = inlined_call_operand.vmem [shape: f32[8], index: 0, kind: input, shape index: {}]
  %s1 = inlined_call_operand.vmem [shape: f32[16,8], index: 1, kind: output, shape index: {}]
  // Predicated region
  $region2: #{tile.8} parent=0 // pred_check
    _
  $region3: #{tile.8} parent=0 // pred_check_branch
    %3 = sbr.rel (0) target = $region5
  $region4: #{tile.8} parent=0 // pred_region
    _
  $region5: #{tile.8} parent=0 // pred_fallthru
    _
  %v4 = vld [vmem:[%s0] ss:$0 sm:$0xff]
  %5 = vst [vmem:[%s1] sm:$0xff] %v4
  %s6 = scalar_lea.vmem %s1, 8
  %7 = vst [vmem:[%s6] sm:$0xff] %v4

// kernel: tile.9
$region0: #{tile.9}
  %s0 = inlined_call_operand.vmem [shape: f32[16,8], index: 0, kind: input, shape index: {}]
  %s1 = inlined_call_operand.vmem [shape: f32[1,128], index: 1, kind: output, shape index: {}]
  $region1: #{tile.9} parent=0
    #allocation0 [shape = 'u8[4096]{0}', space=vmem, size = 0x1000, scoped, tag = 'scoped mem for output reshape']
    %v2 = vld [vmem:[%s0] sm:$0x1]
    %vm3 = vcmask 64512
    %4 = vst.msk [vmem:[#allocation0] sm:$0x1] %vm3, %v2
    %s5 = scalar_lea.vmem %s0, 15
    %v6 = vld [vmem:[%s5] sm:$0x1]
    %7 = vrot.lane.b32.xlu0 %v6, 120
    %v8 = vpop.permute.xlu0 %7
    %vm9 = vcmask 1048512
    %10 = vst.msk [vmem:[#allocation0] sm:$0x1] %vm9, %v8
    %s11 = scalar_lea.vmem %s0, 14
    %v12 = vld [vmem:[%s11] sm:$0x1]
    %13 = vrot.lane.b32.xlu0 %v12, 112
    %v14 = vpop.permute.xlu0 %13
    %vm15 = vcmask 982912
    %16 = vst.msk [vmem:[#allocation0] sm:$0x1] %vm15, %v14
    %s17 = scalar_lea.vmem %s0, 13
    %v18 = vld [vmem:[%s17] sm:$0x1]
    %19 = vrot.lane.b32.xlu0 %v18, 104
    %v20 = vpop.permute.xlu0 %19
    %vm21 = vcmask 917312
    %22 = vst.msk [vmem:[#allocation0] sm:$0x1] %vm21, %v20
    %s23 = scalar_lea.vmem %s0, 12
    %v24 = vld [vmem:[%s23] sm:$0x1]
    %25 = vrot.lane.b32.xlu0 %v24, 96
    %v26 = vpop.permute.xlu0 %25
    %vm27 = vcmask 851712
    %28 = vst.msk [vmem:[#allocation0] sm:$0x1] %vm27, %v26
    %s29 = scalar_lea.vmem %s0, 11
    %v30 = vld [vmem:[%s29] sm:$0x1]
    %31 = vrot.lane.b32.xlu0 %v30, 88
    %v32 = vpop.permute.xlu0 %31
    %vm33 = vcmask 786112
    %34 = vst.msk [vmem:[#allocation0] sm:$0x1] %vm33, %v32
    %s35 = scalar_lea.vmem %s0, 10
    %v36 = vld [vmem:[%s35] sm:$0x1]
    %37 = vrot.lane.b32.xlu0 %v36, 80
    %v38 = vpop.permute.xlu0 %37
    %vm39 = vcmask 720512
    %40 = vst.msk [vmem:[#allocation0] sm:$0x1] %vm39, %v38
    %s41 = scalar_lea.vmem %s0, 9
    %v42 = vld [vmem:[%s41] sm:$0x1]
    %43 = vrot.lane.b32.xlu0 %v42, 72
    %v44 = vpop.permute.xlu0 %43
    %vm45 = vcmask 654912
    %46 = vst.msk [vmem:[#allocation0] sm:$0x1] %vm45, %v44
    %s47 = scalar_lea.vmem %s0, 8
    %v48 = vld [vmem:[%s47] sm:$0x1]
    %49 = vrot.lane.b32.xlu0 %v48, 64
    %v50 = vpop.permute.xlu0 %49
    %vm51 = vcmask 589312
    %52 = vst.msk [vmem:[#allocation0] sm:$0x1] %vm51, %v50
    %s53 = scalar_lea.vmem %s0, 7
    %v54 = vld [vmem:[%s53] sm:$0x1]
    %55 = vrot.lane.b32.xlu0 %v54, 56
    %v56 = vpop.permute.xlu0 %55
    %vm57 = vcmask 523712
    %58 = vst.msk [vmem:[#allocation0] sm:$0x1] %vm57, %v56
    %s59 = scalar_lea.vmem %s0, 6
    %v60 = vld [vmem:[%s59] sm:$0x1]
    %61 = vrot.lane.b32.xlu0 %v60, 48
    %v62 = vpop.permute.xlu0 %61
    %vm63 = vcmask 458112
    %64 = vst.msk [vmem:[#allocation0] sm:$0x1] %vm63, %v62
    %s65 = scalar_lea.vmem %s0, 5
    %v66 = vld [vmem:[%s65] sm:$0x1]
    %67 = vrot.lane.b32.xlu0 %v66, 40
    %v68 = vpop.permute.xlu0 %67
    %vm69 = vcmask 392512
    %70 = vst.msk [vmem:[#allocation0] sm:$0x1] %vm69, %v68
    %s71 = scalar_lea.vmem %s0, 4
    %v72 = vld [vmem:[%s71] sm:$0x1]
    %73 = vrot.lane.b32.xlu0 %v72, 32
    %v74 = vpop.permute.xlu0 %73
    %vm75 = vcmask 326912
    %76 = vst.msk [vmem:[#allocation0] sm:$0x1] %vm75, %v74
    %s77 = scalar_lea.vmem %s0, 3
    %v78 = vld [vmem:[%s77] sm:$0x1]
    %79 = vrot.lane.b32.xlu0 %v78, 24
    %v80 = vpop.permute.xlu0 %79
    %vm81 = vcmask 261312
    %82 = vst.msk [vmem:[#allocation0] sm:$0x1] %vm81, %v80
    %s83 = scalar_lea.vmem %s0, 2
    %v84 = vld [vmem:[%s83] sm:$0x1]
    %85 = vrot.lane.b32.xlu0 %v84, 16
    %v86 = vpop.permute.xlu0 %85
    %vm87 = vcmask 195712
    %88 = vst.msk [vmem:[#allocation0] sm:$0x1] %vm87, %v86
    %s89 = scalar_lea.vmem %s0, 1
    %v90 = vld [vmem:[%s89] sm:$0x1]
    %91 = vrot.lane.b32.xlu0 %v90, 8
    %v92 = vpop.permute.xlu0 %91
    %vm93 = vcmask 130112
    %94 = vst.msk [vmem:[#allocation0] sm:$0x1] %vm93, %v92
    %s96 = sshllo.u32 0, 1
    %v98 = vld [vmem:[#allocation0] sm:%s96]
    %s99 = sshllo.u32 0, 1
    %100 = vst [vmem:[%s1] sm:%s99] %v98

// kernel: conv3x3_relu_pallas.1
$region0: #{conv3x3_relu_pallas.1}
  #allocation0 [shape = 'u32[]', space=smem, size = 0x4, offset = 0x4, fixed_abs, tag = 'smem constant byte address 0x4 - core index']
  #allocation1 [shape = 'u32[144,128]{1,0:T(1,128)}', space=vmem, size = 0x12000, scoped, tag = 'internal scratch']
  %s0 = inlined_call_operand.vmem [shape: bf16[2,18,64], index: 0, kind: input, shape index: {}]
  %s1 = inlined_call_operand.vmem [shape: bf16[3,64,128], index: 1, kind: input, shape index: {}]
  %s2 = inlined_call_operand.vmem [shape: f32[1,128], index: 2, kind: input, shape index: {}]
  %s3 = inlined_call_operand.vmem [shape: f32[2,16,128], index: 3, kind: output, shape index: {}]
  %s4 = sld [smem:[#allocation0]]
  $region45: #{conv3x3_relu_pallas.1} parent=0
    _
  %s6 = ssub.s32 1, %s4
  %s7 = scalar_select 0, %s6, %s4
  loop: start=0, step=1, limit=4
  $region2: #{conv3x3_relu_pallas.1} parent=0 // loop_pre_header
    _
  $region3: #{conv3x3_relu_pallas.1} parent=0 // loop_header
    %s9 = sphi 0, %s13
    %p10 = scmp.ge.s32.totalorder %s9, 4
    %s19 = sphi 0, %s21
    %s22 = sphi 0, %s19
    %s23 = sphi 0, %s22
    %s39 = sphi 0, %s23
    %s43 = sphi 0, %s43
    %s45 = sphi 0, %s43
    %s46 = sphi 0, %s45
    %s60 = sphi 0, %s46
    %s64 = sphi 0, %s64
    %s66 = sphi 0, %s64
    %s67 = sphi 0, %s66
    %s81 = sphi 0, %s67
    %s87 = sphi 0, %s89
    %s90 = sphi 0, %s87
    %s91 = sphi 0, %s90
    %s107 = sphi 0, %s91
  $region4: #{conv3x3_relu_pallas.1} parent=0 // loop_header_branch
    %12 = sbr.rel (%p10) target = $region8
  $region5: #{conv3x3_relu_pallas.1} parent=0 // loop_body
    %s14 = ssub.s32 %s9, 1
    %s15 = ssub.s32 %s9, 2
    %s16 = sadd.s32 %s9, 1
    %s17 = ssub.s32 %s9, %s16
    %p18 = scmp.eq.s32.totalorder %s17, 0
    %s20 = sadd.s32 %s19, 1
    %s21 = scalar_select %p18, %s19, %s20
    %p24 = pneg %p18
    %p25 = scmp.eq.s32.totalorder %s9, 1
    %p26 = por %p24, %p25
    %p27 = scmp.ne.s32.totalorder %s19, %s22
    %p28 = scmp.eq.s32.totalorder %s9, 0
    %p29 = por %p27, %p28
    %p30 = scmp.ne.s32.totalorder %s19, %s22
    %p31 = scmp.eq.s32.totalorder %s14, 1
    %p32 = por %p30, %p31
    %p33 = scmp.ne.s32.totalorder %s22, %s23
    %p34 = scmp.eq.s32.totalorder %s14, 0
    %p35 = por %p33, %p34
    %p36 = scmp.ne.s32.totalorder %s22, %s23
    %p37 = scmp.eq.s32.totalorder %s15, 1
    %p38 = por %p36, %p37
    %p40 = scmp.ne.s32.totalorder %s23, %s39
    %p41 = scmp.eq.s32.totalorder %s15, 0
    %p42 = por %p40, %p41
    %s44 = sadd.s32 %s43, 1
    %p47 = scmp.eq.s32.totalorder %s9, 1
    %p48 = scmp.ne.s32.totalorder %s43, %s45
    %p49 = scmp.eq.s32.totalorder %s9, 0
    %p50 = por %p48, %p49
    %p51 = scmp.ne.s32.totalorder %s43, %s45
    %p52 = scmp.eq.s32.totalorder %s14, 1
    %p53 = por %p51, %p52
    %p54 = scmp.ne.s32.totalorder %s45, %s46
    %p55 = scmp.eq.s32.totalorder %s14, 0
    %p56 = por %p54, %p55
    %p57 = scmp.ne.s32.totalorder %s45, %s46
    %p58 = scmp.eq.s32.totalorder %s15, 1
    %p59 = por %p57, %p58
    %p61 = scmp.ne.s32.totalorder %s46, %s60
    %p62 = scmp.eq.s32.totalorder %s15, 0
    %p63 = por %p61, %p62
    %s65 = sadd.s32 %s64, 1
    %p68 = scmp.eq.s32.totalorder %s9, 1
    %p69 = scmp.ne.s32.totalorder %s64, %s66
    %p70 = scmp.eq.s32.totalorder %s9, 0
    %p71 = por %p69, %p70
    %p72 = scmp.ne.s32.totalorder %s64, %s66
    %p73 = scmp.eq.s32.totalorder %s14, 1
    %p74 = por %p72, %p73
    %p75 = scmp.ne.s32.totalorder %s66, %s67
    %p76 = scmp.eq.s32.totalorder %s14, 0
    %p77 = por %p75, %p76
    %p78 = scmp.ne.s32.totalorder %s66, %s67
    %p79 = scmp.eq.s32.totalorder %s15, 1
    %p80 = por %p78, %p79
    %p82 = scmp.ne.s32.totalorder %s67, %s81
    %p83 = scmp.eq.s32.totalorder %s15, 0
    %p84 = por %p82, %p83
    %s85 = ssub.s32 %s9, %s16
    %p86 = scmp.eq.s32.totalorder %s85, 0
    %s88 = sadd.s32 %s87, 1
    %s89 = scalar_select %p86, %s87, %s88
    %p92 = pneg %p86
    %p93 = scmp.eq.s32.totalorder %s9, 1
    %p94 = por %p92, %p93
    %p95 = scmp.ne.s32.totalorder %s87, %s90
    %p96 = scmp.eq.s32.totalorder %s9, 0
    %p97 = por %p95, %p96
    %p98 = scmp.ne.s32.totalorder %s87, %s90
    %p99 = scmp.eq.s32.totalorder %s14, 1
    %p100 = por %p98, %p99
    %p101 = scmp.ne.s32.totalorder %s90, %s91
    %p102 = scmp.eq.s32.totalorder %s14, 0
    %p103 = por %p101, %p102
    %p104 = scmp.ne.s32.totalorder %s90, %s91
    %p105 = scmp.eq.s32.totalorder %s15, 1
    %p106 = por %p104, %p105
    %p108 = scmp.ne.s32.totalorder %s91, %s107
    %p109 = scmp.eq.s32.totalorder %s15, 0
    %p110 = por %p108, %p109
    %p111 = scmp.le.s32.totalorder 1, %s9
    %p112 = scmp.lt.s32.totalorder %s9, 3
    %p113 = pnand %p111, %p112
    %p114 = pneg %p113
    // Predicated region
    $region9: #{conv3x3_relu_pallas.1} parent=5 // pred_check
      _
    $region10: #{conv3x3_relu_pallas.1} parent=5 // pred_check_branch
      %116 = sbr.rel (%p113) target = $region12
    $region11: #{conv3x3_relu_pallas.1} parent=5 // pred_region
      %s117 = ssub.s32 %s9, 1
      // Predicated region
      $region13: #{conv3x3_relu_pallas.1} parent=11 // pred_check
        %p118 = pneg %p56
      $region14: #{conv3x3_relu_pallas.1} parent=11 // pred_check_branch
        %120 = sbr.rel (%p118) target = $region16
      $region15: #{conv3x3_relu_pallas.1} parent=11 // pred_region
        _
      $region16: #{conv3x3_relu_pallas.1} parent=11 // pred_fallthru
        _
      // Predicated region
      $region17: #{conv3x3_relu_pallas.1} parent=11 // pred_check
        %p121 = pneg %p77
      $region18: #{conv3x3_relu_pallas.1} parent=11 // pred_check_branch
        %123 = sbr.rel (%p121) target = $region20
      $region19: #{conv3x3_relu_pallas.1} parent=11 // pred_region
        _
      $region20: #{conv3x3_relu_pallas.1} parent=11 // pred_fallthru
        _
    $region12: #{conv3x3_relu_pallas.1} parent=5 // pred_fallthru
      _
    %p124 = scmp.lt.s32.totalorder %s9, 2
    // Predicated region
    $region21: #{conv3x3_relu_pallas.1} parent=5 // pred_check
      %p125 = pneg %p124
    $region22: #{conv3x3_relu_pallas.1} parent=5 // pred_check_branch
      %127 = sbr.rel (%p125) target = $region24
    $region23: #{conv3x3_relu_pallas.1} parent=5 // pred_region
      // Predicated region
      $region25: #{conv3x3_relu_pallas.1} parent=23 // pred_check
        %p128 = pneg %p29
      $region26: #{conv3x3_relu_pallas.1} parent=23 // pred_check_branch
        %130 = sbr.rel (%p128) target = $region28
      $region27: #{conv3x3_relu_pallas.1} parent=23 // pred_region
        %p131 = scmp.lt.s32.totalorder %s9, 1
        %s132 = scalar_select %p131, %s9, 1
        %s133 = smul.addr %s132, 3
        %s134 = smul.addr %s133, 4
        %s135 = scalar_lea.vmem %s0, %s134
      $region28: #{conv3x3_relu_pallas.1} parent=23 // pred_fallthru
        _
    $region24: #{conv3x3_relu_pallas.1} parent=5 // pred_fallthru
      _
    %p136 = scmp.le.s32.totalorder 1, %s9
    %p137 = scmp.lt.s32.totalorder %s9, 3
    %p138 = pnand %p136, %p137
    %p139 = pneg %p138
    // Predicated region
    $region29: #{conv3x3_relu_pallas.1} parent=5 // pred_check
      _
    $region30: #{conv3x3_relu_pallas.1} parent=5 // pred_check_branch
      %141 = sbr.rel (%p138) target = $region32
    $region31: #{conv3x3_relu_pallas.1} parent=5 // pred_region
      %s142 = ssub.s32 %s9, 1
      %p143 = scmp.lt.s32.totalorder %s14, 1
      %s144 = scalar_select %p143, %s14, 1
      %s145 = smul.addr %s144, 3
      %s146 = smul.addr %s145, 4
      %s147 = scalar_lea.vmem %s0, %s146
      %p148 = pneg %p35
      %p149 = pneg %p32
      %p150 = pneg %p56
      %p151 = pneg %p53
      %p152 = pneg %p77
      %p153 = pneg %p74
      %p154 = pneg %p103
      %p155 = pneg %p100
      %p156 = scmp.lt.s32.totalorder %s14, 1
      %s157 = scalar_select %p156, %s14, 1
      %s158 = smul.addr %s157, 2
      %s159 = smul.addr %s158, 8
      %s160 = scalar_lea.vmem %s3, %s159
      %p161 = scmp.lt.s32.totalorder %s14, 1
      %s162 = scalar_select %p161, %s14, 1
      %s163 = smul.addr %s162, 3
      %s164 = smul.addr %s163, 4
      %s165 = scalar_lea.vmem %s0, %s164
      %p166 = scmp.lt.s32.totalorder %s14, 1
      %s167 = scalar_select %p166, %s14, 1
      %s168 = smul.addr %s167, 2
      %s169 = smul.addr %s168, 8
      %s170 = scalar_lea.vmem %s3, %s169
      %v172 = vld [vmem:[%s165] sm:$0xf]
      %v173 = vld [vmem:[%s165 + $0x4] sm:$0xf]
      %v174 = vld [vmem:[%s165 + $0x8] sm:$0x1]
      %v175 = vunpack.c.l.bf16 %v172
      %v176 = vunpack.c.l.bf16 %v173
      %v177 = vunpack.c.l.bf16 %v174
      %v178 = vld [vmem:[%s2] sm:$0x1]
      %v180 = vlaneseq
      %v181 = vshrl.u32 %v180, 7
      %v182 = vsub.s32 0, %v181
      %v183 = vrot.slane %v178, %v182
      %v185 = vpack.c.bf16 %v176, %v175
      %v186 = vld [vmem:[%s1] sm:$0xf]
      %v187 = vld [vmem:[%s1 + $0x4] sm:$0xf]
      %v188 = vld [vmem:[%s1 + $0x8] sm:$0xf]
      %v189 = vld [vmem:[%s1 + $0xc] sm:$0xf]
      %v190 = vld [vmem:[%s1 + $0x10] sm:$0xf]
      %v191 = vld [vmem:[%s1 + $0x14] sm:$0xf]
      %v192 = vld [vmem:[%s1 + $0x18] sm:$0xf]
      %v193 = vld [vmem:[%s1 + $0x1c] sm:$0xf]
      %v202 = vunpack.c.l.b16 %v186
      %v203 = vunpack.c.l.b16 %v187
      %v204 = vunpack.c.l.b16 %v188
      %v205 = vunpack.c.l.b16 %v189
      %v206 = vunpack.c.l.b16 %v190
      %v207 = vunpack.c.l.b16 %v191
      %v208 = vunpack.c.l.b16 %v192
      %v209 = vunpack.c.l.b16 %v193
      %v210 = vpack.c.b16 %v203, %v202
      %v211 = vpack.c.b16 %v205, %v204
      %v212 = vpack.c.b16 %v207, %v206
      %v213 = vpack.c.b16 %v209, %v208
      %vm218 = vcmask 523264
      %v220 = vsel %vm218, %v185, 0
      %222 = vmatprep.subr.bf16.mxu0 0
      %223 = vmatpush1.bf16.msra.mxu0 %v210
      %224 = vmatprep.subr.bf16.mxu0 0
      %225 = vmatpush1.bf16.msra.mxu0 %v211
      %226 = vmatprep.subr.bf16.mxu0 0
      %227 = vmatpush1.bf16.msra.mxu0 %v212
      %228 = vmatprep.subr.bf16.mxu0 0
      %229 = vmatpush1.bf16.msra.mxu0 %v213
      %230 = vmatprep.subr.bf16.mxu0 0
      %231 = vmatpush1.bf16.msra.mxu0 0
      %232 = vmatprep.subr.bf16.mxu0 0
      %233 = vmatpush1.bf16.msra.mxu0 0
      %234 = vmatprep.subr.bf16.mxu0 0
      %235 = vmatpush1.bf16.msra.mxu0 0
      %236 = vmatprep.subr.bf16.mxu0 0
      %237 = vmatpush1.bf16.msra.mxu0 0
      %238 = vmatprep.subr.bf16.mxu0 0
      %239 = vmatpush1.bf16.msra.mxu0 0
      %240 = vmatprep.subr.bf16.mxu0 0
      %241 = vmatpush1.bf16.msra.mxu0 0
      %242 = vmatprep.subr.bf16.mxu0 0
      %243 = vmatpush1.bf16.msra.mxu0 0
      %244 = vmatprep.subr.bf16.mxu0 0
      %245 = vmatpush1.bf16.msra.mxu0 0
      %246 = vmatprep.subr.bf16.mxu0 0
      %247 = vmatpush1.bf16.msra.mxu0 0
      %248 = vmatprep.subr.bf16.mxu0 0
      %249 = vmatpush1.bf16.msra.mxu0 0
      %250 = vmatprep.subr.bf16.mxu0 0
      %251 = vmatpush1.bf16.msra.mxu0 0
      %252 = vmatprep.subr.bf16.mxu0 0
      %253 = vmatpush1.bf16.msra.mxu0 0
      %254 = vmatprep.mubr.bf16.mxu0 0
      %255 = vmatmul.mubr.bf16.gmra.mrb[0].mxu0 %v220
      %v256 = vpop.f32.mrb[0].mxu0
      %v257 = vadd.f32 0.0, %v256
      %v258 = vpop.f32.mrb[0].mxu0
      %v259 = vpop.f32.mrb[0].mxu0
      %v260 = vadd.f32 0.0, %v259
      %v261 = vpop.f32.mrb[0].mxu0
      %262 = vdwg.mxu0
      %v263 = vadd.f32 %v183, %v257
      %v264 = vadd.f32 %v183, %v260
      %v265 = vpack.c.bf16 %v177, %v177
      %s266 = scalar_lea.vmem %s1, 32
      %v267 = vld [vmem:[%s266] sm:$0xf]
      %v268 = vld [vmem:[%s266 + $0x4] sm:$0xf]
      %v269 = vld [vmem:[%s266 + $0x8] sm:$0xf]
      %v270 = vld [vmem:[%s266 + $0xc] sm:$0xf]
      %v271 = vld [vmem:[%s266 + $0x10] sm:$0xf]
      %v272 = vld [vmem:[%s266 + $0x14] sm:$0xf]
      %v273 = vld [vmem:[%s266 + $0x18] sm:$0xf]
      %v274 = vld [vmem:[%s266 + $0x1c] sm:$0xf]
      %vm275 = vsmask.f32 7424
      %v276 = vshrl.u32 %v185, 16
      %v278 = vshll.u32 %v185, 16
      %v280 = vrot.slane %v278, 1
      %v281 = vor.u32 %v276, %v280
      %v283 = vshll.u32 %v265, 16
      %v285 = vrot.slane %v283, 1
      %v286 = vsel %vm275, %v281, %v285
      %v295 = vunpack.c.l.b16 %v267
      %v296 = vunpack.c.l.b16 %v268
      %v297 = vunpack.c.l.b16 %v269
      %v298 = vunpack.c.l.b16 %v270
      %v299 = vunpack.c.l.b16 %v271
      %v300 = vunpack.c.l.b16 %v272
      %v301 = vunpack.c.l.b16 %v273
      %v302 = vunpack.c.l.b16 %v274
      %v303 = vpack.c.b16 %v296, %v295
      %v304 = vpack.c.b16 %v298, %v297
      %v305 = vpack.c.b16 %v300, %v299
      %v306 = vpack.c.b16 %v302, %v301
      %v312 = vsel %vm218, %v286, 0
      %314 = vmatprep.subr.bf16.mxu0 0
      %315 = vmatpush1.bf16.msra.mxu0 %v303
      %316 = vmatprep.subr.bf16.mxu0 0
      %317 = vmatpush1.bf16.msra.mxu0 %v304
      %318 = vmatprep.subr.bf16.mxu0 0
      %319 = vmatpush1.bf16.msra.mxu0 %v305
      %320 = vmatprep.subr.bf16.mxu0 0
      %321 = vmatpush1.bf16.msra.mxu0 %v306
      %322 = vmatprep.subr.bf16.mxu0 0
      %323 = vmatpush1.bf16.msra.mxu0 0
      %324 = vmatprep.subr.bf16.mxu0 0
      %325 = vmatpush1.bf16.msra.mxu0 0
      %326 = vmatprep.subr.bf16.mxu0 0
      %327 = vmatpush1.bf16.msra.mxu0 0
      %328 = vmatprep.subr.bf16.mxu0 0
      %329 = vmatpush1.bf16.msra.mxu0 0
      %330 = vmatprep.subr.bf16.mxu0 0
      %331 = vmatpush1.bf16.msra.mxu0 0
      %332 = vmatprep.subr.bf16.mxu0 0
      %333 = vmatpush1.bf16.msra.mxu0 0
      %334 = vmatprep.subr.bf16.mxu0 0
      %335 = vmatpush1.bf16.msra.mxu0 0
      %336 = vmatprep.subr.bf16.mxu0 0
      %337 = vmatpush1.bf16.msra.mxu0 0
      %338 = vmatprep.subr.bf16.mxu0 0
      %339 = vmatpush1.bf16.msra.mxu0 0
      %340 = vmatprep.subr.bf16.mxu0 0
      %341 = vmatpush1.bf16.msra.mxu0 0
      %342 = vmatprep.subr.bf16.mxu0 0
      %343 = vmatpush1.bf16.msra.mxu0 0
      %344 = vmatprep.subr.bf16.mxu0 0
      %345 = vmatpush1.bf16.msra.mxu0 0
      %346 = vmatprep.mubr.bf16.mxu0 0
      %347 = vmatmul.mubr.bf16.gmra.mrb[0].mxu0 %v312
      %v348 = vpop.f32.mrb[0].mxu0
      %v349 = vadd.f32 0.0, %v348
      %v350 = vpop.f32.mrb[0].mxu0
      %v351 = vpop.f32.mrb[0].mxu0
      %v352 = vadd.f32 0.0, %v351
      %v353 = vpop.f32.mrb[0].mxu0
      %354 = vdwg.mxu0
      %v355 = vadd.f32 %v263, %v349
      %v356 = vadd.f32 %v264, %v352
      %s357 = scalar_lea.vmem %s1, 64
      %v358 = vld [vmem:[%s357] sm:$0xf]
      %v359 = vld [vmem:[%s357 + $0x4] sm:$0xf]
      %v360 = vld [vmem:[%s357 + $0x8] sm:$0xf]
      %v361 = vld [vmem:[%s357 + $0xc] sm:$0xf]
      %v362 = vld [vmem:[%s357 + $0x10] sm:$0xf]
      %v363 = vld [vmem:[%s357 + $0x14] sm:$0xf]
      %v364 = vld [vmem:[%s357 + $0x18] sm:$0xf]
      %v365 = vld [vmem:[%s357 + $0x1c] sm:$0xf]
      %vm368 = vcmask 1046528
      %v369 = vrot.slane %v185, 1
      %v370 = vrot.slane %v265, 1
      %v371 = vsel %vm368, %v369, %v370
      %v380 = vunpack.c.l.b16 %v358
      %v381 = vunpack.c.l.b16 %v359
      %v382 = vunpack.c.l.b16 %v360
      %v383 = vunpack.c.l.b16 %v361
      %v384 = vunpack.c.l.b16 %v362
      %v385 = vunpack.c.l.b16 %v363
      %v386 = vunpack.c.l.b16 %v364
      %v387 = vunpack.c.l.b16 %v365
      %v388 = vpack.c.b16 %v381, %v380
      %v389 = vpack.c.b16 %v383, %v382
      %v390 = vpack.c.b16 %v385, %v384
      %v391 = vpack.c.b16 %v387, %v386
      %v397 = vsel %vm218, %v371, 0
      %399 = vmatprep.subr.bf16.mxu0 0
      %400 = vmatpush1.bf16.msra.mxu0 %v388
      %401 = vmatprep.subr.bf16.mxu0 0
      %402 = vmatpush1.bf16.msra.mxu0 %v389
      %403 = vmatprep.subr.bf16.mxu0 0
      %404 = vmatpush1.bf16.msra.mxu0 %v390
      %405 = vmatprep.subr.bf16.mxu0 0
      %406 = vmatpush1.bf16.msra.mxu0 %v391
      %407 = vmatprep.subr.bf16.mxu0 0
      %408 = vmatpush1.bf16.msra.mxu0 0
      %409 = vmatprep.subr.bf16.mxu0 0
      %410 = vmatpush1.bf16.msra.mxu0 0
      %411 = vmatprep.subr.bf16.mxu0 0
      %412 = vmatpush1.bf16.msra.mxu0 0
      %413 = vmatprep.subr.bf16.mxu0 0
      %414 = vmatpush1.bf16.msra.mxu0 0
      %415 = vmatprep.subr.bf16.mxu0 0
      %416 = vmatpush1.bf16.msra.mxu0 0
      %417 = vmatprep.subr.bf16.mxu0 0
      %418 = vmatpush1.bf16.msra.mxu0 0
      %419 = vmatprep.subr.bf16.mxu0 0
      %420 = vmatpush1.bf16.msra.mxu0 0
      %421 = vmatprep.subr.bf16.mxu0 0
      %422 = vmatpush1.bf16.msra.mxu0 0
      %423 = vmatprep.subr.bf16.mxu0 0
      %424 = vmatpush1.bf16.msra.mxu0 0
      %425 = vmatprep.subr.bf16.mxu0 0
      %426 = vmatpush1.bf16.msra.mxu0 0
      %427 = vmatprep.subr.bf16.mxu0 0
      %428 = vmatpush1.bf16.msra.mxu0 0
      %429 = vmatprep.subr.bf16.mxu0 0
      %430 = vmatpush1.bf16.msra.mxu0 0
      %431 = vmatprep.mubr.bf16.mxu0 0
      %432 = vmatmul.mubr.bf16.gmra.mrb[0].mxu0 %v397
      %v433 = vpop.f32.mrb[0].mxu0
      %v434 = vadd.f32 0.0, %v433
      %v435 = vpop.f32.mrb[0].mxu0
      %v436 = vpop.f32.mrb[0].mxu0
      %v437 = vadd.f32 0.0, %v436
      %v438 = vpop.f32.mrb[0].mxu0
      %439 = vdwg.mxu0
      %v440 = vadd.f32 %v355, %v434
      %v441 = vadd.f32 %v356, %v437
      %v442 = vmax.f32 %v440, 0.0
      %v443 = vmax.f32 %v441, 0.0
      %444 = vst [vmem:[%s170] sm:$0xff] %v442
      %445 = vst [vmem:[%s170 + $0x8] sm:$0xff] %v443
      %p446 = scmp.lt.s32.totalorder %s14, 1
      %s447 = scalar_select %p446, %s14, 1
      %s448 = smul.addr %s447, 2
      %s449 = smul.addr %s448, 8
      %s450 = scalar_lea.vmem %s3, %s449
      // Predicated region
      $region33: #{conv3x3_relu_pallas.1} parent=31 // pred_check
        %p451 = pneg %p100
      $region34: #{conv3x3_relu_pallas.1} parent=31 // pred_check_branch
        %453 = sbr.rel (%p451) target = $region36
      $region35: #{conv3x3_relu_pallas.1} parent=31 // pred_region
        _
      $region36: #{conv3x3_relu_pallas.1} parent=31 // pred_fallthru
        _
    $region32: #{conv3x3_relu_pallas.1} parent=5 // pred_fallthru
      _
    %p454 = scmp.le.s32.totalorder 2, %s9
    // Predicated region
    $region37: #{conv3x3_relu_pallas.1} parent=5 // pred_check
      %p455 = pneg %p454
    $region38: #{conv3x3_relu_pallas.1} parent=5 // pred_check_branch
      %457 = sbr.rel (%p455) target = $region40
    $region39: #{conv3x3_relu_pallas.1} parent=5 // pred_region
      %s458 = ssub.s32 %s9, 2
      // Predicated region
      $region41: #{conv3x3_relu_pallas.1} parent=39 // pred_check
        %p459 = pneg %p106
      $region42: #{conv3x3_relu_pallas.1} parent=39 // pred_check_branch
        %461 = sbr.rel (%p459) target = $region44
      $region43: #{conv3x3_relu_pallas.1} parent=39 // pred_region
        %p462 = scmp.lt.s32.totalorder %s15, 1
        %s463 = scalar_select %p462, %s15, 1
        %s464 = smul.addr %s463, 2
        %s465 = smul.addr %s464, 8
        %s466 = scalar_lea.vmem %s3, %s465
      $region44: #{conv3x3_relu_pallas.1} parent=39 // pred_fallthru
        _
    $region40: #{conv3x3_relu_pallas.1} parent=5 // pred_fallthru
      _
  $region6: #{conv3x3_relu_pallas.1} parent=0 // loop_footer
    %s13 = sadd.s32 1, %s9
  $region7: #{conv3x3_relu_pallas.1} parent=0 // loop_footer_branch
    %8 = sbr.rel target = $region3
  $region8: #{conv3x3_relu_pallas.1} parent=0 // loop_exit
    _

</llo_original>
